<compile_context>
chip_gen: v6e
topology: v6e:2x2x1
jax: 0.10.0
libtpu: 0.0.40
codegen_flags: <defaults>
</compile_context>

<pallas_src>
from functools import partial

import jax
import jax.numpy as jnp
from jax import lax
from jax.experimental import pallas as pl
from jax.experimental.pallas import tpu as pltpu


def _round_up(x: int, m: int) -> int:
    return ((x + m - 1) // m) * m


# ---------------------------------------------------------------------------
# Fused kernel: conv3x3(+bias) -> ELU -> spatial-mask contraction ->
#               per-neuron feature contraction -> bias -> Softplus.
# One grid step == one batch element; everything lives in VMEM.
# ---------------------------------------------------------------------------
def _encoder_fused_kernel(xcol_ref, wcol_ref, cb_ref, mask_ref, feat_ref,
                          rb_ref, out_ref):
    # xcol_ref: (9*C_in, HW)    f32  im2col'd input, channel-major, 1 batch elem
    # wcol_ref: (C_hid, 9*C_in) f32  conv weights, tap-major along K
    # cb_ref  : (C_hid, 1)      f32  conv bias
    # mask_ref: (HW, N_pad)     f32  spatial masks, neurons lane-major
    # feat_ref: (C_hid, N_pad)  f32  per-neuron feature weights
    # rb_ref  : (1, N_pad)      f32  readout bias
    # out_ref : (1, N_pad)      f32  neurons lane-major
    # conv3x3 as a single MXU matmul (M=C_hid, K=9*C_in, N=HW), channel-major
    z = jnp.dot(wcol_ref[...], xcol_ref[...],
                preferred_element_type=jnp.float32) + cb_ref[...]
    # fused ELU(alpha=1) -- exp rides the EUP slot
    core = jnp.where(z > 0.0, z, jnp.exp(jnp.minimum(z, 0.0)) - 1.0)
    # factorized readout: spatial contraction as one MXU matmul (K = HW) ...
    s = jnp.dot(core, mask_ref[...], preferred_element_type=jnp.float32)
    # ... then per-neuron feature contraction over channels (sublane reduce,
    # result already lane-dense over neurons) + bias
    r = jnp.sum(s * feat_ref[...], axis=0, keepdims=True) + rb_ref[...]
    # numerically stable Softplus epilogue (exp/log on the EUP)
    out_ref[...] = jnp.maximum(r, 0.0) + jnp.log(1.0 + jnp.exp(-jnp.abs(r)))


def encoder_forward(params, x_nchw):
    conv_w = params["conv_w"].astype(jnp.float32)      # (C_hid, C_in, 3, 3)
    conv_b = params["conv_b"].astype(jnp.float32)      # (C_hid,)
    mask = params["mask"].astype(jnp.float32)          # (N, H, W)
    feat = params["feat"].astype(jnp.float32)          # (N, C_hid)
    rbias = params["readout_b"].astype(jnp.float32)    # (N,)

    B, C_in, H, W = x_nchw.shape
    C_hid = conv_w.shape[0]
    N = mask.shape[0]
    HW = H * W
    K9C = 9 * C_in
    N_pad = _round_up(N, 128)       # neurons lane-dense

    # --- wrapper-side layout prep (tiny one-time transforms under jit) ------
    # im2col, channel-major: x_colT[b, (dy*3+dx)*C_in + c, h*W + w]
    #                        = x_pad[b, h+dy, w+dx, c]
    x_nhwc = jnp.transpose(x_nchw, (0, 2, 3, 1)).astype(jnp.float32)
    x_pad = jnp.pad(x_nhwc, ((0, 0), (1, 1), (1, 1), (0, 0)))
    patches = [x_pad[:, dy:dy + H, dx:dx + W, :]
               for dy in range(3) for dx in range(3)]
    x_col = jnp.stack(patches, axis=3).reshape(B, HW, K9C)   # (B, HW, 9*C_in)
    x_colT = jnp.transpose(x_col, (0, 2, 1))                 # (B, 9*C_in, HW)

    # (C_hid, C_in, 3, 3) -> (C_hid, 9*C_in) with the same tap/channel order
    w_col = jnp.transpose(conv_w, (0, 2, 3, 1)).reshape(C_hid, K9C)
    cb = conv_b.reshape(C_hid, 1)

    mask_col = jnp.transpose(
        jnp.pad(mask.reshape(N, HW), ((0, N_pad - N), (0, 0))), (1, 0))   # (HW, N_pad)
    feat_col = jnp.transpose(
        jnp.pad(feat, ((0, N_pad - N), (0, 0))), (1, 0))                  # (C_hid, N_pad)
    rb = jnp.pad(rbias, (0, N_pad - N)).reshape(1, N_pad)

    out = pl.pallas_call(
        _encoder_fused_kernel,
        out_shape=jax.ShapeDtypeStruct((B, 1, N_pad), jnp.float32),
        grid=(B,),
        in_specs=[
            pl.BlockSpec((None, K9C, HW), lambda b: (b, 0, 0)),
            pl.BlockSpec((C_hid, K9C), lambda b: (0, 0)),
            pl.BlockSpec((C_hid, 1), lambda b: (0, 0)),
            pl.BlockSpec((HW, N_pad), lambda b: (0, 0)),
            pl.BlockSpec((C_hid, N_pad), lambda b: (0, 0)),
            pl.BlockSpec((1, N_pad), lambda b: (0, 0)),
        ],
        out_specs=pl.BlockSpec((None, 1, N_pad), lambda b: (b, 0, 0)),
        compiler_params=pltpu.CompilerParams(
            dimension_semantics=("parallel",)),   # B >= 2 -> both v7x TCs busy
    )(x_colT, w_col, cb, mask_col, feat_col, rb)
    # padded neurons evaluate softplus(0)=log 2 and are sliced off here
    return out.reshape(B, N_pad)[:, :N]


# ---------------------------------------------------------------------------
# Encoder wrapper: readout(core(x)), optional detach of the core output.
# ---------------------------------------------------------------------------
class PallasEncoder:
    def __init__(self, params):
        self.params = params

    def __call__(self, x_nchw, data_key=None, detach_core=False):
        # TODO(synk): data_key selects a per-session readout head in openretina;
        # a single readout head is instantiated here, so data_key is ignored.
        # TODO(synk): detach_core only changes gradients (forward values are
        # identical); the fused kernel has no custom VJP, so it is a no-op here.
        del data_key, detach_core
        return encoder_forward(self.params, x_nchw)


# ---------------------------------------------------------------------------
# Pure-JAX f32 reference
# ---------------------------------------------------------------------------
def reference_forward(params, x_nchw):
    x = jnp.transpose(x_nchw, (0, 2, 3, 1)).astype(jnp.float32)
    w = jnp.transpose(params["conv_w"].astype(jnp.float32), (2, 3, 1, 0))
    core = lax.conv_general_dilated(
        x, w, window_strides=(1, 1), padding=((1, 1), (1, 1)),
        dimension_numbers=("NHWC", "HWIO", "NHWC"),
        precision=lax.Precision.HIGHEST) + params["conv_b"].astype(jnp.float32)
    core = jnp.where(core > 0, core, jnp.exp(jnp.minimum(core, 0.0)) - 1.0)
    s = jnp.einsum("bhwc,nhw->bnc", core, params["mask"].astype(jnp.float32),
                   precision=lax.Precision.HIGHEST)
    z = jnp.einsum("bnc,nc->bn", s, params["feat"].astype(jnp.float32),
                   precision=lax.Precision.HIGHEST) + params["readout_b"]
    return jnp.maximum(z, 0.0) + jnp.log1p(jnp.exp(-jnp.abs(z)))


if __name__ == "__main__":
    key = jax.random.PRNGKey(0)
    B, C_in, H, W = 2, 4, 16, 16
    C_hid, N_neurons = 32, 50

    ks = jax.random.split(key, 6)
    x = jax.random.normal(ks[0], (B, C_in, H, W), jnp.float32)
    params = {
        "conv_w": jax.random.normal(ks[1], (C_hid, C_in, 3, 3), jnp.float32) / (3.0 * C_in ** 0.5),
        "conv_b": 0.1 * jax.random.normal(ks[2], (C_hid,), jnp.float32),
        "mask": jax.random.normal(ks[3], (N_neurons, H, W), jnp.float32) / float(H * W) ** 0.5,
        "feat": jax.random.normal(ks[4], (N_neurons, C_hid), jnp.float32) / float(C_hid) ** 0.5,
        "readout_b": 0.1 * jax.random.normal(ks[5], (N_neurons,), jnp.float32),
    }

    encoder = PallasEncoder(params)
    fwd = jax.jit(lambda xx: encoder(xx, detach_core=True))
    out = jax.block_until_ready(fwd(x))
    assert out.shape == (B, N_neurons), out.shape

    ref = jax.block_until_ready(jax.jit(partial(reference_forward, params))(x))
    max_err = float(jnp.max(jnp.abs(out - ref)))
    if not (max_err < 2e-2):
        raise AssertionError(f"Pallas output mismatch vs reference: max abs err={max_err}")

    print("KERNEL_OK")
</pallas_src>

<mosaic_0001>
module attributes {stable_mosaic.version = 11 : i64} {
  func.func @_encoder_fused_kernel(%arg0: i32, %arg1: memref<1x36x256xf32, #tpu.memory_space<vmem>>, %arg2: memref<32x36xf32, #tpu.memory_space<vmem>>, %arg3: memref<32x1xf32, #tpu.memory_space<vmem>>, %arg4: memref<256x128xf32, #tpu.memory_space<vmem>>, %arg5: memref<32x128xf32, #tpu.memory_space<vmem>>, %arg6: memref<1x128xf32, #tpu.memory_space<vmem>>, %arg7: memref<1x1x128xf32, #tpu.memory_space<vmem>>) attributes {dimension_semantics = [#tpu.dimension_semantics<parallel>], iteration_bounds = array<i64: 2>, scalar_prefetch = 0 : i64, scratch_operands = 0 : i64, tpu.core_type = #tpu.core_type<tc>, window_params = [{transform_indices = @transform_0, window_bounds = array<i64: 1, 36, 256>}, {pipeline_mode = #tpu.pipeline_mode<synchronous>, transform_indices = @transform_1, window_bounds = array<i64: 32, 36>}, {pipeline_mode = #tpu.pipeline_mode<synchronous>, transform_indices = @transform_2, window_bounds = array<i64: 32, 1>}, {pipeline_mode = #tpu.pipeline_mode<synchronous>, transform_indices = @transform_3, window_bounds = array<i64: 256, 128>}, {pipeline_mode = #tpu.pipeline_mode<synchronous>, transform_indices = @transform_4, window_bounds = array<i64: 32, 128>}, {pipeline_mode = #tpu.pipeline_mode<synchronous>, transform_indices = @transform_5, window_bounds = array<i64: 1, 128>}, {transform_indices = @transform_6, window_bounds = array<i64: 1, 1, 128>}]} {
    %c0 = arith.constant 0 : index
    %c0_0 = arith.constant 0 : index
    %0 = vector.load %arg2[%c0, %c0_0] : memref<32x36xf32, #tpu.memory_space<vmem>>, vector<32x36xf32>
    %c0_1 = arith.constant 0 : index
    %c0_2 = arith.constant 0 : index
    %c0_3 = arith.constant 0 : index
    %1 = vector.load %arg1[%c0_1, %c0_2, %c0_3] : memref<1x36x256xf32, #tpu.memory_space<vmem>>, vector<1x36x256xf32>
    %2 = vector.shape_cast %1 : vector<1x36x256xf32> to vector<36x256xf32>
    %cst = arith.constant dense<0.000000e+00> : vector<32x256xf32>
    %3 = tpu.matmul %0, %2, %cst {dimension_numbers = #tpu.dot_dimension_numbers<[1], [0], [0], [1], [0, 0, 1, 1], [], []>} : vector<32x36xf32>, vector<36x256xf32>, vector<32x256xf32> -> vector<32x256xf32>
    %c0_4 = arith.constant 0 : index
    %c0_5 = arith.constant 0 : index
    %4 = vector.load %arg3[%c0_4, %c0_5] : memref<32x1xf32, #tpu.memory_space<vmem>>, vector<32x1xf32>
    %5 = vector.broadcast %4 : vector<32x1xf32> to vector<32x256xf32>
    %6 = arith.addf %3, %5 : vector<32x256xf32>
    %cst_6 = arith.constant 0.000000e+00 : f32
    %7 = vector.broadcast %cst_6 : f32 to vector<32x256xf32>
    %8 = arith.cmpf ogt, %6, %7 : vector<32x256xf32>
    %cst_7 = arith.constant 0.000000e+00 : f32
    %9 = vector.broadcast %cst_7 : f32 to vector<32x256xf32>
    %10 = arith.minimumf %6, %9 : vector<32x256xf32>
    %11 = math.exp %10 : vector<32x256xf32>
    %cst_8 = arith.constant 1.000000e+00 : f32
    %12 = vector.broadcast %cst_8 : f32 to vector<32x256xf32>
    %13 = arith.subf %11, %12 : vector<32x256xf32>
    %14 = arith.select %8, %6, %13 : vector<32x256xi1>, vector<32x256xf32>
    %c0_9 = arith.constant 0 : index
    %c0_10 = arith.constant 0 : index
    %15 = vector.load %arg4[%c0_9, %c0_10] : memref<256x128xf32, #tpu.memory_space<vmem>>, vector<256x128xf32>
    %cst_11 = arith.constant dense<0.000000e+00> : vector<32x128xf32>
    %16 = tpu.matmul %14, %15, %cst_11 {dimension_numbers = #tpu.dot_dimension_numbers<[1], [0], [0], [1], [0, 0, 1, 1], [], []>} : vector<32x256xf32>, vector<256x128xf32>, vector<32x128xf32> -> vector<32x128xf32>
    %c0_12 = arith.constant 0 : index
    %c0_13 = arith.constant 0 : index
    %17 = vector.load %arg5[%c0_12, %c0_13] : memref<32x128xf32, #tpu.memory_space<vmem>>, vector<32x128xf32>
    %18 = arith.mulf %16, %17 : vector<32x128xf32>
    %cst_14 = arith.constant dense<0.000000e+00> : vector<128xf32>
    %19 = vector.multi_reduction <add>, %18, %cst_14 [0] : vector<32x128xf32> to vector<128xf32>
    %20 = vector.shape_cast %19 : vector<128xf32> to vector<1x128xf32>
    %c0_15 = arith.constant 0 : index
    %c0_16 = arith.constant 0 : index
    %21 = vector.load %arg6[%c0_15, %c0_16] : memref<1x128xf32, #tpu.memory_space<vmem>>, vector<1x128xf32>
    %22 = arith.addf %20, %21 : vector<1x128xf32>
    %cst_17 = arith.constant 0.000000e+00 : f32
    %23 = vector.broadcast %cst_17 : f32 to vector<1x128xf32>
    %24 = arith.maximumf %22, %23 : vector<1x128xf32>
    %25 = math.absf %22 : vector<1x128xf32>
    %cst_18 = arith.constant 0.000000e+00 : f32
    %26 = vector.broadcast %cst_18 : f32 to vector<1x128xf32>
    %27 = arith.subf %26, %25 : vector<1x128xf32>
    %28 = math.exp %27 : vector<1x128xf32>
    %cst_19 = arith.constant 1.000000e+00 : f32
    %29 = vector.broadcast %cst_19 : f32 to vector<1x128xf32>
    %30 = arith.addf %29, %28 : vector<1x128xf32>
    %31 = math.log %30 : vector<1x128xf32>
    %32 = arith.addf %24, %31 : vector<1x128xf32>
    %c0_20 = arith.constant 0 : index
    %c0_21 = arith.constant 0 : index
    %c0_22 = arith.constant 0 : index
    %33 = vector.load %arg7[%c0_20, %c0_21, %c0_22] : memref<1x1x128xf32, #tpu.memory_space<vmem>>, vector<1x1x128xf32>
    %34 = vector.shape_cast %33 : vector<1x1x128xf32> to vector<1x128xf32>
    %35 = vector.shape_cast %32 : vector<1x128xf32> to vector<1x1x128xf32>
    tpu.vector_store %arg7[%c0_20, %c0_21, %c0_22], %35 {strides = array<i32>} : memref<1x1x128xf32, #tpu.memory_space<vmem>>, vector<1x1x128xf32>,
    return
  }
  func.func @transform_0(%arg0: i32) -> (i32, i32, i32) {
    %c0_i32 = arith.constant 0 : i32
    %c0_i32_0 = arith.constant 0 : i32
    %c0_i32_1 = arith.constant 0 : i32
    return %arg0, %c0_i32, %c0_i32_0 : i32, i32, i32
  }
  func.func @transform_1(%arg0: i32) -> (i32, i32) {
    %c0_i32 = arith.constant 0 : i32
    %c0_i32_0 = arith.constant 0 : i32
    %c0_i32_1 = arith.constant 0 : i32
    return %c0_i32, %c0_i32_0 : i32, i32
  }
  func.func @transform_2(%arg0: i32) -> (i32, i32) {
    %c0_i32 = arith.constant 0 : i32
    %c0_i32_0 = arith.constant 0 : i32
    %c0_i32_1 = arith.constant 0 : i32
    return %c0_i32, %c0_i32_0 : i32, i32
  }
  func.func @transform_3(%arg0: i32) -> (i32, i32) {
    %c0_i32 = arith.constant 0 : i32
    %c0_i32_0 = arith.constant 0 : i32
    %c0_i32_1 = arith.constant 0 : i32
    return %c0_i32, %c0_i32_0 : i32, i32
  }
  func.func @transform_4(%arg0: i32) -> (i32, i32) {
    %c0_i32 = arith.constant 0 : i32
    %c0_i32_0 = arith.constant 0 : i32
    %c0_i32_1 = arith.constant 0 : i32
    return %c0_i32, %c0_i32_0 : i32, i32
  }
  func.func @transform_5(%arg0: i32) -> (i32, i32) {
    %c0_i32 = arith.constant 0 : i32
    %c0_i32_0 = arith.constant 0 : i32
    %c0_i32_1 = arith.constant 0 : i32
    return %c0_i32, %c0_i32_0 : i32, i32
  }
  func.func @transform_6(%arg0: i32) -> (i32, i32, i32) {
    %c0_i32 = arith.constant 0 : i32
    %c0_i32_0 = arith.constant 0 : i32
    %c0_i32_1 = arith.constant 0 : i32
    return %arg0, %c0_i32, %c0_i32_0 : i32, i32, i32
  }
}

</mosaic_0001>

<llo_original>
// kernel: _lambda_.1
$region0: #{_lambda_.1}
  #allocation0 [shape = 'u32[]', space=smem, size = 0x4, offset = 0x4, fixed_abs, tag = 'smem constant byte address 0x4 - core index']
  #allocation1 [shape = 'u32[144,128]{1,0:T(1,128)}', space=vmem, size = 0x12000, scoped, tag = 'internal scratch']
  %s0 = inlined_call_operand.vmem [shape: f32[2,36,256], index: 0, kind: input, shape index: {}]
  %s1 = inlined_call_operand.vmem [shape: f32[32,36], index: 1, kind: input, shape index: {}]
  %s2 = inlined_call_operand.vmem [shape: f32[32,1], index: 2, kind: input, shape index: {}]
  %s3 = inlined_call_operand.vmem [shape: f32[256,128], index: 3, kind: input, shape index: {}]
  %s4 = inlined_call_operand.vmem [shape: f32[32,128], index: 4, kind: input, shape index: {}]
  %s5 = inlined_call_operand.vmem [shape: f32[1,128], index: 5, kind: input, shape index: {}]
  %s6 = inlined_call_operand.hbm [shape: f32[2,1,128], index: 6, kind: output, shape index: {}]
  %s7 = sld [smem:[#allocation0]]
  $region57: #{_lambda_.1} parent=0
    _
  %s9 = ssub.s32 1, %s7
  %s10 = scalar_select 0, %s9, %s7
  $region1: #{_lambda_.1} parent=0
    #allocation2 [shape = 'u8[1024]{0}', space=vmem, size = 0x400, scoped, tag = 'output window, operand 0']
    #allocation3 [shape = 's32[2]{0}', space=sflag, size = 0x8, scoped, tag = 'scoped memory for _lambda_.1']
    %11 = vsyncpa [#allocation3], 0
    %s12 = scalar_lea.sflag [#allocation3], 1
    %13 = vsyncpa %s12, 0
    loop: start=0, step=1, limit=4
    $region2: #{_lambda_.1} parent=1 // loop_pre_header
      _
    $region3: #{_lambda_.1} parent=1 // loop_header
      %s15 = sphi 0, %s19
      %p16 = scmp.ge.s32.totalorder %s15, 4
      %s25 = sphi 0, %s27
      %s28 = sphi 0, %s25
      %s29 = sphi 0, %s28
      %s45 = sphi 0, %s29
      %s49 = sphi 0, %s49
      %s51 = sphi 0, %s49
      %s52 = sphi 0, %s51
      %s66 = sphi 0, %s52
      %s70 = sphi 0, %s70
      %s72 = sphi 0, %s70
      %s73 = sphi 0, %s72
      %s87 = sphi 0, %s73
      %s91 = sphi 0, %s91
      %s93 = sphi 0, %s91
      %s94 = sphi 0, %s93
      %s108 = sphi 0, %s94
      %s112 = sphi 0, %s112
      %s114 = sphi 0, %s112
      %s115 = sphi 0, %s114
      %s129 = sphi 0, %s115
      %s133 = sphi 0, %s133
      %s135 = sphi 0, %s133
      %s136 = sphi 0, %s135
      %s150 = sphi 0, %s136
      %s156 = sphi 0, %s158
      %s159 = sphi 0, %s156
      %s160 = sphi 0, %s159
      %s176 = sphi 0, %s160
    $region4: #{_lambda_.1} parent=1 // loop_header_branch
      %18 = sbr.rel (%p16) target = $region8
    $region5: #{_lambda_.1} parent=1 // loop_body
      %s20 = ssub.s32 %s15, 1
      %s21 = ssub.s32 %s15, 2
      %s22 = sadd.s32 %s15, 1
      %s23 = ssub.s32 %s15, %s22
      %p24 = scmp.eq.s32.totalorder %s23, 0
      %s26 = sadd.s32 %s25, 1
      %s27 = scalar_select %p24, %s25, %s26
      %p30 = pneg %p24
      %p31 = scmp.eq.s32.totalorder %s15, 1
      %p32 = por %p30, %p31
      %p33 = scmp.ne.s32.totalorder %s25, %s28
      %p34 = scmp.eq.s32.totalorder %s15, 0
      %p35 = por %p33, %p34
      %p36 = scmp.ne.s32.totalorder %s25, %s28
      %p37 = scmp.eq.s32.totalorder %s20, 1
      %p38 = por %p36, %p37
      %p39 = scmp.ne.s32.totalorder %s28, %s29
      %p40 = scmp.eq.s32.totalorder %s20, 0
      %p41 = por %p39, %p40
      %p42 = scmp.ne.s32.totalorder %s28, %s29
      %p43 = scmp.eq.s32.totalorder %s21, 1
      %p44 = por %p42, %p43
      %p46 = scmp.ne.s32.totalorder %s29, %s45
      %p47 = scmp.eq.s32.totalorder %s21, 0
      %p48 = por %p46, %p47
      %s50 = sadd.s32 %s49, 1
      %p53 = scmp.eq.s32.totalorder %s15, 1
      %p54 = scmp.ne.s32.totalorder %s49, %s51
      %p55 = scmp.eq.s32.totalorder %s15, 0
      %p56 = por %p54, %p55
      %p57 = scmp.ne.s32.totalorder %s49, %s51
      %p58 = scmp.eq.s32.totalorder %s20, 1
      %p59 = por %p57, %p58
      %p60 = scmp.ne.s32.totalorder %s51, %s52
      %p61 = scmp.eq.s32.totalorder %s20, 0
      %p62 = por %p60, %p61
      %p63 = scmp.ne.s32.totalorder %s51, %s52
      %p64 = scmp.eq.s32.totalorder %s21, 1
      %p65 = por %p63, %p64
      %p67 = scmp.ne.s32.totalorder %s52, %s66
      %p68 = scmp.eq.s32.totalorder %s21, 0
      %p69 = por %p67, %p68
      %s71 = sadd.s32 %s70, 1
      %p74 = scmp.eq.s32.totalorder %s15, 1
      %p75 = scmp.ne.s32.totalorder %s70, %s72
      %p76 = scmp.eq.s32.totalorder %s15, 0
      %p77 = por %p75, %p76
      %p78 = scmp.ne.s32.totalorder %s70, %s72
      %p79 = scmp.eq.s32.totalorder %s20, 1
      %p80 = por %p78, %p79
      %p81 = scmp.ne.s32.totalorder %s72, %s73
      %p82 = scmp.eq.s32.totalorder %s20, 0
      %p83 = por %p81, %p82
      %p84 = scmp.ne.s32.totalorder %s72, %s73
      %p85 = scmp.eq.s32.totalorder %s21, 1
      %p86 = por %p84, %p85
      %p88 = scmp.ne.s32.totalorder %s73, %s87
      %p89 = scmp.eq.s32.totalorder %s21, 0
      %p90 = por %p88, %p89
      %s92 = sadd.s32 %s91, 1
      %p95 = scmp.eq.s32.totalorder %s15, 1
      %p96 = scmp.ne.s32.totalorder %s91, %s93
      %p97 = scmp.eq.s32.totalorder %s15, 0
      %p98 = por %p96, %p97
      %p99 = scmp.ne.s32.totalorder %s91, %s93
      %p100 = scmp.eq.s32.totalorder %s20, 1
      %p101 = por %p99, %p100
      %p102 = scmp.ne.s32.totalorder %s93, %s94
      %p103 = scmp.eq.s32.totalorder %s20, 0
      %p104 = por %p102, %p103
      %p105 = scmp.ne.s32.totalorder %s93, %s94
      %p106 = scmp.eq.s32.totalorder %s21, 1
      %p107 = por %p105, %p106
      %p109 = scmp.ne.s32.totalorder %s94, %s108
      %p110 = scmp.eq.s32.totalorder %s21, 0
      %p111 = por %p109, %p110
      %s113 = sadd.s32 %s112, 1
      %p116 = scmp.eq.s32.totalorder %s15, 1
      %p117 = scmp.ne.s32.totalorder %s112, %s114
      %p118 = scmp.eq.s32.totalorder %s15, 0
      %p119 = por %p117, %p118
      %p120 = scmp.ne.s32.totalorder %s112, %s114
      %p121 = scmp.eq.s32.totalorder %s20, 1
      %p122 = por %p120, %p121
      %p123 = scmp.ne.s32.totalorder %s114, %s115
      %p124 = scmp.eq.s32.totalorder %s20, 0
      %p125 = por %p123, %p124
      %p126 = scmp.ne.s32.totalorder %s114, %s115
      %p127 = scmp.eq.s32.totalorder %s21, 1
      %p128 = por %p126, %p127
      %p130 = scmp.ne.s32.totalorder %s115, %s129
      %p131 = scmp.eq.s32.totalorder %s21, 0
      %p132 = por %p130, %p131
      %s134 = sadd.s32 %s133, 1
      %p137 = scmp.eq.s32.totalorder %s15, 1
      %p138 = scmp.ne.s32.totalorder %s133, %s135
      %p139 = scmp.eq.s32.totalorder %s15, 0
      %p140 = por %p138, %p139
      %p141 = scmp.ne.s32.totalorder %s133, %s135
      %p142 = scmp.eq.s32.totalorder %s20, 1
      %p143 = por %p141, %p142
      %p144 = scmp.ne.s32.totalorder %s135, %s136
      %p145 = scmp.eq.s32.totalorder %s20, 0
      %p146 = por %p144, %p145
      %p147 = scmp.ne.s32.totalorder %s135, %s136
      %p148 = scmp.eq.s32.totalorder %s21, 1
      %p149 = por %p147, %p148
      %p151 = scmp.ne.s32.totalorder %s136, %s150
      %p152 = scmp.eq.s32.totalorder %s21, 0
      %p153 = por %p151, %p152
      %s154 = ssub.s32 %s15, %s22
      %p155 = scmp.eq.s32.totalorder %s154, 0
      %s157 = sadd.s32 %s156, 1
      %s158 = scalar_select %p155, %s156, %s157
      %p161 = pneg %p155
      %p162 = scmp.eq.s32.totalorder %s15, 1
      %p163 = por %p161, %p162
      %p164 = scmp.ne.s32.totalorder %s156, %s159
      %p165 = scmp.eq.s32.totalorder %s15, 0
      %p166 = por %p164, %p165
      %p167 = scmp.ne.s32.totalorder %s156, %s159
      %p168 = scmp.eq.s32.totalorder %s20, 1
      %p169 = por %p167, %p168
      %p170 = scmp.ne.s32.totalorder %s159, %s160
      %p171 = scmp.eq.s32.totalorder %s20, 0
      %p172 = por %p170, %p171
      %p173 = scmp.ne.s32.totalorder %s159, %s160
      %p174 = scmp.eq.s32.totalorder %s21, 1
      %p175 = por %p173, %p174
      %p177 = scmp.ne.s32.totalorder %s160, %s176
      %p178 = scmp.eq.s32.totalorder %s21, 0
      %p179 = por %p177, %p178
      %p180 = scmp.le.s32.totalorder 1, %s15
      %p181 = scmp.lt.s32.totalorder %s15, 3
      %p182 = pnand %p180, %p181
      %p183 = pneg %p182
      // Predicated region
      $region9: #{_lambda_.1} parent=5 // pred_check
        _
      $region10: #{_lambda_.1} parent=5 // pred_check_branch
        %185 = sbr.rel (%p182) target = $region12
      $region11: #{_lambda_.1} parent=5 // pred_region
        %s186 = ssub.s32 %s15, 1
        // Predicated region
        $region13: #{_lambda_.1} parent=11 // pred_check
          %p187 = pneg %p62
        $region14: #{_lambda_.1} parent=11 // pred_check_branch
          %189 = sbr.rel (%p187) target = $region16
        $region15: #{_lambda_.1} parent=11 // pred_region
          _
        $region16: #{_lambda_.1} parent=11 // pred_fallthru
          _
        // Predicated region
        $region17: #{_lambda_.1} parent=11 // pred_check
          %p190 = pneg %p83
        $region18: #{_lambda_.1} parent=11 // pred_check_branch
          %192 = sbr.rel (%p190) target = $region20
        $region19: #{_lambda_.1} parent=11 // pred_region
          _
        $region20: #{_lambda_.1} parent=11 // pred_fallthru
          _
        // Predicated region
        $region21: #{_lambda_.1} parent=11 // pred_check
          %p193 = pneg %p104
        $region22: #{_lambda_.1} parent=11 // pred_check_branch
          %195 = sbr.rel (%p193) target = $region24
        $region23: #{_lambda_.1} parent=11 // pred_region
          _
        $region24: #{_lambda_.1} parent=11 // pred_fallthru
          _
        // Predicated region
        $region25: #{_lambda_.1} parent=11 // pred_check
          %p196 = pneg %p125
        $region26: #{_lambda_.1} parent=11 // pred_check_branch
          %198 = sbr.rel (%p196) target = $region28
        $region27: #{_lambda_.1} parent=11 // pred_region
          _
        $region28: #{_lambda_.1} parent=11 // pred_fallthru
          _
        // Predicated region
        $region29: #{_lambda_.1} parent=11 // pred_check
          %p199 = pneg %p146
        $region30: #{_lambda_.1} parent=11 // pred_check_branch
          %201 = sbr.rel (%p199) target = $region32
        $region31: #{_lambda_.1} parent=11 // pred_region
          _
        $region32: #{_lambda_.1} parent=11 // pred_fallthru
          _
      $region12: #{_lambda_.1} parent=5 // pred_fallthru
        _
      %p202 = scmp.lt.s32.totalorder %s15, 2
      // Predicated region
      $region33: #{_lambda_.1} parent=5 // pred_check
        %p203 = pneg %p202
      $region34: #{_lambda_.1} parent=5 // pred_check_branch
        %205 = sbr.rel (%p203) target = $region36
      $region35: #{_lambda_.1} parent=5 // pred_region
        // Predicated region
        $region37: #{_lambda_.1} parent=35 // pred_check
          %p206 = pneg %p35
        $region38: #{_lambda_.1} parent=35 // pred_check_branch
          %208 = sbr.rel (%p206) target = $region40
        $region39: #{_lambda_.1} parent=35 // pred_region
          %p209 = scmp.lt.s32.totalorder %s15, 1
          %s210 = scalar_select %p209, %s15, 1
          %s211 = smul.addr %s210, 10
          %s212 = smul.addr %s211, 8
          %s213 = scalar_lea.vmem %s0, %s212
        $region40: #{_lambda_.1} parent=35 // pred_fallthru
          _
      $region36: #{_lambda_.1} parent=5 // pred_fallthru
        _
      %p214 = scmp.le.s32.totalorder 1, %s15
      %p215 = scmp.lt.s32.totalorder %s15, 3
      %p216 = pnand %p214, %p215
      %p217 = pneg %p216
      // Predicated region
      $region41: #{_lambda_.1} parent=5 // pred_check
        _
      $region42: #{_lambda_.1} parent=5 // pred_check_branch
        %219 = sbr.rel (%p216) target = $region44
      $region43: #{_lambda_.1} parent=5 // pred_region
        %s220 = ssub.s32 %s15, 1
        %p221 = scmp.lt.s32.totalorder %s20, 1
        %s222 = scalar_select %p221, %s20, 1
        %s223 = smul.addr %s222, 10
        %s224 = smul.addr %s223, 8
        %s225 = scalar_lea.vmem %s0, %s224
        %p226 = pneg %p41
        %p227 = pneg %p38
        %p228 = pneg %p62
        %p229 = pneg %p59
        %p230 = pneg %p83
        %p231 = pneg %p80
        %p232 = pneg %p104
        %p233 = pneg %p101
        %p234 = pneg %p125
        %p235 = pneg %p122
        %p236 = pneg %p146
        %p237 = pneg %p143
        %p238 = pneg %p172
        %p239 = pneg %p169
        %s240 = sand.u32 %s159, 1
        %s241 = scalar_lea.sflag [#allocation3], %s240
        %s242 = sand.u32 %s159, 1
        %s243 = scalar_lea.vmem [#allocation2], %s242
        %p244 = scmp.lt.s32.totalorder %s20, 1
        %s245 = scalar_select %p244, %s20, 1
        %s246 = smul.addr %s245, 10
        %s247 = smul.addr %s246, 8
        %s248 = scalar_lea.vmem %s0, %s247
        %v249 = vld [vmem:[%s1] sm:$0xff]
        %v250 = vld [vmem:[%s1 + $0x8] sm:$0xff]
        %v251 = vld [vmem:[%s1 + $0x10] sm:$0xff]
        %v252 = vld [vmem:[%s1 + $0x18] sm:$0xff]
        %v253 = vld [vmem:[%s248] sm:$0xff]
        %v254 = vld [vmem:[%s248 + $0x8] sm:$0xff]
        %v255 = vld [vmem:[%s248 + $0x10] sm:$0xff]
        %v256 = vld [vmem:[%s248 + $0x18] sm:$0xff]
        %v257 = vld [vmem:[%s248 + $0x20] sm:$0xff]
        %v258 = vld [vmem:[%s248 + $0x28] sm:$0xff]
        %v259 = vld [vmem:[%s248 + $0x30] sm:$0xff]
        %v260 = vld [vmem:[%s248 + $0x38] sm:$0xff]
        %v261 = vld [vmem:[%s248 + $0x40] sm:$0xf]
        %v262 = vld [vmem:[%s248 + $0x48] sm:$0xf]
        %v263 = vld [vmem:[%s2] sm:$0xff]
        %v264 = vld [vmem:[%s2 + $0x8] sm:$0xff]
        %v265 = vld [vmem:[%s2 + $0x10] sm:$0xff]
        %v266 = vld [vmem:[%s2 + $0x18] sm:$0xff]
        %268 = vset.pattern.permute.xlu0 0
        %269 = vperm.xlu0 %268, %v263
        %v270 = vpop.permute.xlu0 %269
        %273 = vset.pattern.permute.xlu0 0
        %274 = vperm.xlu0 %273, %v264
        %v275 = vpop.permute.xlu0 %274
        %278 = vset.pattern.permute.xlu0 0
        %279 = vperm.xlu0 %278, %v265
        %v280 = vpop.permute.xlu0 %279
        %283 = vset.pattern.permute.xlu0 0
        %284 = vperm.xlu0 %283, %v266
        %v285 = vpop.permute.xlu0 %284
        %vm287 = vcmask 293888
        %v289 = vsel %vm287, %v249, 0
        %v292 = vsel %vm287, %v250, 0
        %v295 = vsel %vm287, %v251, 0
        %v298 = vsel %vm287, %v252, 0
        %vm300 = vcmask 1043456
        %v302 = vsel %vm300, %v261, 0
        %v305 = vsel %vm300, %v262, 0
        %307 = vmatprep.subr.mxu0 0.0
        %308 = vmatpush1.msra.mxu0 0.0
        %309 = vmatprep.subr.mxu0 0.0
        %310 = vmatpush1.msra.mxu0 0.0
        %311 = vmatprep.subr.mxu0 0.0
        %312 = vmatpush1.msra.mxu0 0.0
        %313 = vmatprep.subr.mxu0 0.0
        %314 = vmatpush1.msra.mxu0 0.0
        %315 = vmatprep.subr.mxu0 0.0
        %316 = vmatpush1.msra.mxu0 0.0
        %317 = vmatprep.subr.mxu0 0.0
        %318 = vmatpush1.msra.mxu0 0.0
        %319 = vmatprep.subr.mxu0 0.0
        %320 = vmatpush1.msra.mxu0 0.0
        %321 = vmatprep.subr.mxu0 0.0
        %322 = vmatpush1.msra.mxu0 0.0
        %323 = vmatprep.subr.mxu0 0.0
        %324 = vmatpush1.msra.mxu0 0.0
        %325 = vmatprep.subr.mxu0 0.0
        %326 = vmatpush1.msra.mxu0 0.0
        %327 = vmatprep.subr.mxu0 0.0
        %328 = vmatpush1.msra.mxu0 0.0
        %329 = vmatprep.subr.mxu0 %v305
        %330 = vmatpush1.msra.mxu0 %v302
        %331 = vmatprep.subr.mxu0 %v260
        %332 = vmatpush1.msra.mxu0 %v259
        %333 = vmatprep.subr.mxu0 %v258
        %334 = vmatpush1.msra.mxu0 %v257
        %335 = vmatprep.subr.mxu0 %v256
        %336 = vmatpush1.msra.mxu0 %v255
        %337 = vmatprep.subr.mxu0 %v254
        %338 = vmatpush1.msra.mxu0 %v253
        %339 = vmatprep.subr.mxu0 0.0
        %340 = vmatpush2.msra.mxu0 0.0
        %341 = vmatprep.subr.mxu0 0.0
        %342 = vmatpush2.msra.mxu0 0.0
        %343 = vmatprep.subr.mxu0 0.0
        %344 = vmatpush2.msra.mxu0 0.0
        %345 = vmatprep.subr.mxu0 0.0
        %346 = vmatpush2.msra.mxu0 0.0
        %347 = vmatprep.subr.mxu0 0.0
        %348 = vmatpush2.msra.mxu0 0.0
        %349 = vmatprep.subr.mxu0 0.0
        %350 = vmatpush2.msra.mxu0 0.0
        %351 = vmatprep.subr.mxu0 0.0
        %352 = vmatpush2.msra.mxu0 0.0
        %353 = vmatprep.subr.mxu0 0.0
        %354 = vmatpush2.msra.mxu0 0.0
        %355 = vmatprep.subr.mxu0 0.0
        %356 = vmatpush2.msra.mxu0 0.0
        %357 = vmatprep.subr.mxu0 0.0
        %358 = vmatpush2.msra.mxu0 0.0
        %359 = vmatprep.subr.mxu0 0.0
        %360 = vmatpush2.msra.mxu0 0.0
        %361 = vmatprep.subr.mxu0 0.0
        %362 = vmatpush2.msra.mxu0 0.0
        %363 = vmatprep.subr.mxu0 0.0
        %364 = vmatpush2.msra.mxu0 0.0
        %365 = vmatprep.subr.mxu0 0.0
        %366 = vmatpush2.msra.mxu0 0.0
        %367 = vmatprep.subr.mxu0 0.0
        %368 = vmatpush2.msra.mxu0 0.0
        %369 = vmatprep.subr.mxu0 0.0
        %370 = vmatpush2.msra.mxu0 0.0
        %371 = vmatprep.mubr.f32.mxu0 0.0
        %372 = vmatmul.mubr.f32.gmra.mxu0 %v289
        %v373 = vpop.f32.mrf.mxu0
        %v374 = vadd.f32 %v270, %v373
        %v375 = vpop.f32.mrf.mxu0
        %v376 = vadd.f32 %v270, %v375
        %377 = vmatprep.mubr.f32.mxu0 0.0
        %378 = vmatmul.mubr.f32.gmra.mxu0 %v292
        %v379 = vpop.f32.mrf.mxu0
        %v380 = vadd.f32 %v275, %v379
        %v381 = vpop.f32.mrf.mxu0
        %v382 = vadd.f32 %v275, %v381
        %383 = vmatprep.mubr.f32.mxu0 0.0
        %384 = vmatmul.mubr.f32.gmra.mxu0 %v295
        %v385 = vpop.f32.mrf.mxu0
        %v386 = vadd.f32 %v280, %v385
        %v387 = vpop.f32.mrf.mxu0
        %v388 = vadd.f32 %v280, %v387
        %389 = vmatprep.mubr.f32.mxu0 0.0
        %390 = vmatmul.mubr.f32.gmra.mxu0 %v298
        %v391 = vpop.f32.mrf.mxu0
        %v392 = vadd.f32 %v285, %v391
        %v393 = vpop.f32.mrf.mxu0
        %v394 = vadd.f32 %v285, %v393
        %395 = vdwg.mxu0
        %vm396 = vcmp.gt.f32.partialorder %v374, 0.0
        %vm397 = vcmp.gt.f32.partialorder %v376, 0.0
        %vm398 = vcmp.gt.f32.partialorder %v380, 0.0
        %vm399 = vcmp.gt.f32.partialorder %v382, 0.0
        %vm400 = vcmp.gt.f32.partialorder %v386, 0.0
        %vm401 = vcmp.gt.f32.partialorder %v388, 0.0
        %vm402 = vcmp.gt.f32.partialorder %v392, 0.0
        %vm403 = vcmp.gt.f32.partialorder %v394, 0.0
        %v404 = vmin.f32 %v374, 0.0
        %v405 = vmin.f32 %v376, 0.0
        %v406 = vmin.f32 %v380, 0.0
        %v407 = vmin.f32 %v382, 0.0
        %v408 = vmin.f32 %v386, 0.0
        %v409 = vmin.f32 %v388, 0.0
        %v410 = vmin.f32 %v392, 0.0
        %v411 = vmin.f32 %v394, 0.0
        %v412 = vmul.f32 %v404, 1.442695
        %v413 = vpow.pop %v412
        %v414 = vmul.f32 %v405, 1.442695
        %v415 = vpow.pop %v414
        %v416 = vmul.f32 %v406, 1.442695
        %v417 = vpow.pop %v416
        %v418 = vmul.f32 %v407, 1.442695
        %v419 = vpow.pop %v418
        %v420 = vmul.f32 %v408, 1.442695
        %v421 = vpow.pop %v420
        %v422 = vmul.f32 %v409, 1.442695
        %v423 = vpow.pop %v422
        %v424 = vmul.f32 %v410, 1.442695
        %v425 = vpow.pop %v424
        %v426 = vmul.f32 %v411, 1.442695
        %v427 = vpow.pop %v426
        %v428 = vsub.f32 %v413, 1.0
        %v429 = vsub.f32 %v415, 1.0
        %v430 = vsub.f32 %v417, 1.0
        %v431 = vsub.f32 %v419, 1.0
        %v432 = vsub.f32 %v421, 1.0
        %v433 = vsub.f32 %v423, 1.0
        %v434 = vsub.f32 %v425, 1.0
        %v435 = vsub.f32 %v427, 1.0
        %v436 = vsel %vm396, %v374, %v428
        %v437 = vsel %vm397, %v376, %v429
        %v438 = vsel %vm398, %v380, %v430
        %v439 = vsel %vm399, %v382, %v431
        %v440 = vsel %vm400, %v386, %v432
        %v441 = vsel %vm401, %v388, %v433
        %v442 = vsel %vm402, %v392, %v434
        %v443 = vsel %vm403, %v394, %v435
        %v444 = vld [vmem:[%s3] sm:$0xff]
        %v445 = vld [vmem:[%s3 + $0x8] sm:$0xff]
        %v446 = vld [vmem:[%s3 + $0x10] sm:$0xff]
        %v447 = vld [vmem:[%s3 + $0x18] sm:$0xff]
        %v448 = vld [vmem:[%s3 + $0x20] sm:$0xff]
        %v449 = vld [vmem:[%s3 + $0x28] sm:$0xff]
        %v450 = vld [vmem:[%s3 + $0x30] sm:$0xff]
        %v451 = vld [vmem:[%s3 + $0x38] sm:$0xff]
        %v452 = vld [vmem:[%s3 + $0x40] sm:$0xff]
        %v453 = vld [vmem:[%s3 + $0x48] sm:$0xff]
        %v454 = vld [vmem:[%s3 + $0x50] sm:$0xff]
        %v455 = vld [vmem:[%s3 + $0x58] sm:$0xff]
        %v456 = vld [vmem:[%s3 + $0x60] sm:$0xff]
        %v457 = vld [vmem:[%s3 + $0x68] sm:$0xff]
        %v458 = vld [vmem:[%s3 + $0x70] sm:$0xff]
        %v459 = vld [vmem:[%s3 + $0x78] sm:$0xff]
        %v460 = vld [vmem:[%s3 + $0x80] sm:$0xff]
        %v461 = vld [vmem:[%s3 + $0x88] sm:$0xff]
        %v462 = vld [vmem:[%s3 + $0x90] sm:$0xff]
        %v463 = vld [vmem:[%s3 + $0x98] sm:$0xff]
        %v464 = vld [vmem:[%s3 + $0xa0] sm:$0xff]
        %v465 = vld [vmem:[%s3 + $0xa8] sm:$0xff]
        %v466 = vld [vmem:[%s3 + $0xb0] sm:$0xff]
        %v467 = vld [vmem:[%s3 + $0xb8] sm:$0xff]
        %v468 = vld [vmem:[%s3 + $0xc0] sm:$0xff]
        %v469 = vld [vmem:[%s3 + $0xc8] sm:$0xff]
        %v470 = vld [vmem:[%s3 + $0xd0] sm:$0xff]
        %v471 = vld [vmem:[%s3 + $0xd8] sm:$0xff]
        %v472 = vld [vmem:[%s3 + $0xe0] sm:$0xff]
        %v473 = vld [vmem:[%s3 + $0xe8] sm:$0xff]
        %v474 = vld [vmem:[%s3 + $0xf0] sm:$0xff]
        %v475 = vld [vmem:[%s3 + $0xf8] sm:$0xff]
        %476 = vmatprep.subr.mxu0 0.0
        %477 = vmatpush1.msra.mxu0 %v459
        %478 = vmatprep.subr.mxu0 0.0
        %479 = vmatpush1.msra.mxu0 %v458
        %480 = vmatprep.subr.mxu0 0.0
        %481 = vmatpush1.msra.mxu0 %v457
        %482 = vmatprep.subr.mxu0 0.0
        %483 = vmatpush1.msra.mxu0 %v456
        %484 = vmatprep.subr.mxu0 0.0
        %485 = vmatpush1.msra.mxu0 %v455
        %486 = vmatprep.subr.mxu0 0.0
        %487 = vmatpush1.msra.mxu0 %v454
        %488 = vmatprep.subr.mxu0 0.0
        %489 = vmatpush1.msra.mxu0 %v453
        %490 = vmatprep.subr.mxu0 0.0
        %491 = vmatpush1.msra.mxu0 %v452
        %492 = vmatprep.subr.mxu0 0.0
        %493 = vmatpush1.msra.mxu0 %v451
        %494 = vmatprep.subr.mxu0 0.0
        %495 = vmatpush1.msra.mxu0 %v450
        %496 = vmatprep.subr.mxu0 0.0
        %497 = vmatpush1.msra.mxu0 %v449
        %498 = vmatprep.subr.mxu0 0.0
        %499 = vmatpush1.msra.mxu0 %v448
        %500 = vmatprep.subr.mxu0 0.0
        %501 = vmatpush1.msra.mxu0 %v447
        %502 = vmatprep.subr.mxu0 0.0
        %503 = vmatpush1.msra.mxu0 %v446
        %504 = vmatprep.subr.mxu0 0.0
        %505 = vmatpush1.msra.mxu0 %v445
        %506 = vmatprep.subr.mxu0 0.0
        %507 = vmatpush1.msra.mxu0 %v444
        %508 = vmatprep.subr.mxu0 0.0
        %509 = vmatpush2.msra.mxu0 %v475
        %510 = vmatprep.subr.mxu0 0.0
        %511 = vmatpush2.msra.mxu0 %v474
        %512 = vmatprep.subr.mxu0 0.0
        %513 = vmatpush2.msra.mxu0 %v473
        %514 = vmatprep.subr.mxu0 0.0
        %515 = vmatpush2.msra.mxu0 %v472
        %516 = vmatprep.subr.mxu0 0.0
        %517 = vmatpush2.msra.mxu0 %v471
        %518 = vmatprep.subr.mxu0 0.0
        %519 = vmatpush2.msra.mxu0 %v470
        %520 = vmatprep.subr.mxu0 0.0
        %521 = vmatpush2.msra.mxu0 %v469
        %522 = vmatprep.subr.mxu0 0.0
        %523 = vmatpush2.msra.mxu0 %v468
        %524 = vmatprep.subr.mxu0 0.0
        %525 = vmatpush2.msra.mxu0 %v467
        %526 = vmatprep.subr.mxu0 0.0
        %527 = vmatpush2.msra.mxu0 %v466
        %528 = vmatprep.subr.mxu0 0.0
        %529 = vmatpush2.msra.mxu0 %v465
        %530 = vmatprep.subr.mxu0 0.0
        %531 = vmatpush2.msra.mxu0 %v464
        %532 = vmatprep.subr.mxu0 0.0
        %533 = vmatpush2.msra.mxu0 %v463
        %534 = vmatprep.subr.mxu0 0.0
        %535 = vmatpush2.msra.mxu0 %v462
        %536 = vmatprep.subr.mxu0 0.0
        %537 = vmatpush2.msra.mxu0 %v461
        %538 = vmatprep.subr.mxu0 0.0
        %539 = vmatpush2.msra.mxu0 %v460
        %540 = vmatprep.mubr.f32.mxu0 %v437
        %541 = vmatmul.mubr.f32.gmra.mxu0 %v436
        %v542 = vpop.f32.mrf.mxu0
        %v543 = vadd.f32 0.0, %v542
        %v544 = vpop.f32.mrf.mxu0
        %545 = vmatprep.mubr.f32.mxu0 %v439
        %546 = vmatmul.mubr.f32.gmra.mxu0 %v438
        %v547 = vpop.f32.mrf.mxu0
        %v548 = vadd.f32 0.0, %v547
        %v549 = vpop.f32.mrf.mxu0
        %550 = vmatprep.mubr.f32.mxu0 %v441
        %551 = vmatmul.mubr.f32.gmra.mxu0 %v440
        %v552 = vpop.f32.mrf.mxu0
        %v553 = vadd.f32 0.0, %v552
        %v554 = vpop.f32.mrf.mxu0
        %555 = vmatprep.mubr.f32.mxu0 %v443
        %556 = vmatmul.mubr.f32.gmra.mxu0 %v442
        %v557 = vpop.f32.mrf.mxu0
        %v558 = vadd.f32 0.0, %v557
        %v559 = vpop.f32.mrf.mxu0
        %560 = vdwg.mxu0
        %v561 = vld [vmem:[%s4] sm:$0xff]
        %v562 = vld [vmem:[%s4 + $0x8] sm:$0xff]
        %v563 = vld [vmem:[%s4 + $0x10] sm:$0xff]
        %v564 = vld [vmem:[%s4 + $0x18] sm:$0xff]
        %v565 = vmul.f32 %v543, %v561
        %v566 = vmul.f32 %v548, %v562
        %v567 = vmul.f32 %v553, %v563
        %v568 = vmul.f32 %v558, %v564
        %v569 = vadd.f32 %v565, %v566
        %v570 = vadd.f32 %v569, %v567
        %v571 = vadd.f32 %v570, %v568
        %v572 = vrot.slane %v571, 4
        %v573 = vadd.f32 %v571, %v572
        %v574 = vrot.slane %v573, 2
        %v575 = vadd.f32 %v573, %v574
        %v576 = vrot.slane %v575, 1
        %v577 = vadd.f32 %v575, %v576
        %v578 = vld [vmem:[%s5] sm:$0x1]
        %v579 = vadd.f32 %v577, %v578
        %v580 = vmax.f32 %v579, 0.0
        %v581 = vand.u32 2147483647, %v579
        %v582 = vsub.f32 0.0, %v581
        %v583 = vmul.f32 %v582, 1.442695
        %v584 = vpow.pop %v583
        %v585 = vadd.f32 %v584, 1.0
        %v586 = vlog2.pop %v585
        %v587 = vmul.f32 %v586, 0.6931472
        %v588 = vadd.f32 %v580, %v587
        %589 = vst [vmem:[%s243] sm:$0x1] %v588
        %s590 = sand.u32 %s159, 1
        %s591 = scalar_lea.sflag [#allocation3], %s590
        %s592 = sand.u32 %s159, 1
        %s593 = scalar_lea.vmem [#allocation2], %s592
        // Predicated region
        $region45: #{_lambda_.1} parent=43 // pred_check
          %p594 = pneg %p169
        $region46: #{_lambda_.1} parent=43 // pred_check_branch
          %596 = sbr.rel (%p594) target = $region48
        $region47: #{_lambda_.1} parent=43 // pred_region
          %s598 = ssub.s32 16, 16
          %599 = vsyncadd %s591, %s598
          %s600 = smul.addr %s20, 16
          %s601 = scalar_lea.hbm %s6, %s600
          %s603 = sshll.u32 %s593, 4
          %s604 = int_to_ptr.vmem [resolvable:$true] %s603
          %606 = dma.vmem_to_hbm [thread:$0]  %s604, 16, %s601, %s591
        $region48: #{_lambda_.1} parent=43 // pred_fallthru
          _
      $region44: #{_lambda_.1} parent=5 // pred_fallthru
        _
      %p607 = scmp.le.s32.totalorder 2, %s15
      // Predicated region
      $region49: #{_lambda_.1} parent=5 // pred_check
        %p608 = pneg %p607
      $region50: #{_lambda_.1} parent=5 // pred_check_branch
        %610 = sbr.rel (%p608) target = $region52
      $region51: #{_lambda_.1} parent=5 // pred_region
        %s611 = ssub.s32 %s15, 2
        // Predicated region
        $region53: #{_lambda_.1} parent=51 // pred_check
          %p612 = pneg %p175
        $region54: #{_lambda_.1} parent=51 // pred_check_branch
          %614 = sbr.rel (%p612) target = $region56
        $region55: #{_lambda_.1} parent=51 // pred_region
          %s615 = sand.u32 %s160, 1
          %s616 = scalar_lea.sflag [#allocation3], %s615
          %s617 = sand.u32 %s160, 1
          %s618 = scalar_lea.vmem [#allocation2], %s617
          %619 = dma.done %s616, 16
        $region56: #{_lambda_.1} parent=51 // pred_fallthru
          _
      $region52: #{_lambda_.1} parent=5 // pred_fallthru
        _
    $region6: #{_lambda_.1} parent=1 // loop_footer
      %s19 = sadd.s32 1, %s15
    $region7: #{_lambda_.1} parent=1 // loop_footer_branch
      %14 = sbr.rel target = $region3
    $region8: #{_lambda_.1} parent=1 // loop_exit
      _
    %620 = vsyncpa [#allocation3], 1
    %s621 = scalar_lea.sflag [#allocation3], 1
    %622 = vsyncpa %s621, 1

</llo_original>
